<compile_context>
chip_gen: v7x
topology: tpu7x:2x2x1
jax: 0.10.0
libtpu: 0.0.40
codegen_flags: <defaults>
</compile_context>

<pallas_src>
import math

import jax
import jax.numpy as jnp
from jax import lax
from jax.experimental import pallas as pl
from jax.experimental.pallas import tpu as pltpu

LRELU_SLOPE = 0.2


def _round_up(x, m):
    return (x + m - 1) // m * m


def _vmem_limit_bytes():
    """Generation-aware scoped-VMEM limit (leave compiler headroom)."""
    cap = 64 * 1024 * 1024
    try:
        cap = int(getattr(pltpu.get_tpu_info(), "vmem_capacity_bytes", cap))
    except Exception:
        pass
    if cap >= 100 * 1024 * 1024:          # v5e / v6e: 128 MiB physical
        return 96 * 1024 * 1024
    return 44 * 1024 * 1024               # v7x: 64 MiB physical


# ---------------------------------------------------------------------------
# Fused kernel: K-tiled over Din with one (2*bb, H) pre-activation accumulator
# (fake rows | real rows); W1 VMEM-resident; Gram passed in pre-computed.
# Epilogue produces per-row D(fake), D(real) and the per-row grad sum-of-squares.
# ---------------------------------------------------------------------------
def _fused_loss_kernel(alpha_ref, x_ref, w1_ref, gram_ref, b1_ref, w2_ref,
                       b2_ref, outf_ref, outr_ref, ss_ref, z_acc):
    k = pl.program_id(1)
    bk = x_ref.shape[1]
    bb = alpha_ref.shape[0]        # batch tile; x/z hold 2*bb rows (fake|real)

    @pl.when(k == 0)
    def _init():
        z_acc[...] = jnp.zeros_like(z_acc)

    # W1 is VMEM-resident (constant block index); slice the current K tile.
    start = pl.multiple_of(k * bk, 128)
    w1t = w1_ref[pl.ds(start, bk), :]                              # (bk, H) bf16
    # One fused MXU pass for fake (rows [0,bb)) and real (rows [bb,2bb)).
    z_acc[...] += jnp.dot(x_ref[...], w1t,
                          preferred_element_type=jnp.float32)      # (2bb, H)

    @pl.when(k == pl.num_programs(1) - 1)
    def _epilogue():
        b1 = b1_ref[...]                                           # (1, H)
        w2row = w2_ref[...]                                        # (1, H)
        b2 = b2_ref[0, 0]                                          # SMEM scalar
        a = alpha_ref[...]                                         # (bb, 1)

        z = z_acc[...] + b1                                        # bias once
        zf = z[:bb]                                                # (bb, H)
        zr = z[bb:]                                                # (bb, H)
        # pre-activation is linear in x => z_interp = a*z_fake + (1-a)*z_real
        zi = a * zf + (1.0 - a) * zr

        af = jnp.where(zf > 0, zf, LRELU_SLOPE * zf)
        ar = jnp.where(zr > 0, zr, LRELU_SLOPE * zr)

        # H -> 1 projection on VPU + XLU (row-sum) instead of an N=1 MXU pass.
        out_f = jnp.sum(af * w2row, axis=-1, keepdims=True) + b2   # (bb, 1)
        out_r = jnp.sum(ar * w2row, axis=-1, keepdims=True) + b2   # (bb, 1)

        # ||dD/dx_b||^2 = gz_b G gz_b^T  with gz = lrelu'(z_i)*w2, G = W1^T W1
        gz = jnp.where(zi > 0, 1.0, LRELU_SLOPE) * w2row           # (bb, H)
        gzG = jnp.dot(gz, gram_ref[...],
                      preferred_element_type=jnp.float32)          # (bb, H)
        ss = jnp.sum(gzG * gz, axis=-1, keepdims=True)             # (bb, 1)

        # Lane-dense (bb, 128) output slabs (no masked 1-lane stores).
        outf_ref[...] = jnp.broadcast_to(out_f, outf_ref.shape)
        outr_ref[...] = jnp.broadcast_to(out_r, outr_ref.shape)
        ss_ref[...] = jnp.broadcast_to(ss, ss_ref.shape)


# ---------------------------------------------------------------------------
# Full LossDiscriminator.forward
# ---------------------------------------------------------------------------
def loss_discriminator(params, img_fake, img_real, alpha, *,
                       block_k=8192, block_b=256):
    """params = (w1, b1, w2, b2); img_* are NCHW; alpha is (B, 1) ~ U[0,1)."""
    w1, b1, w2, b2 = params
    B = img_fake.shape[0]
    Din = math.prod(img_fake.shape[1:])
    H = w1.shape[1]

    # bf16 streaming operands (halves dominant HBM traffic), f32 accumulation.
    fake = img_fake.reshape(B, Din).astype(jnp.bfloat16)   # .detach() is a no-op
    real = img_real.reshape(B, Din).astype(jnp.bfloat16)
    w1b = w1.astype(jnp.bfloat16)

    # --- tiling / padding -------------------------------------------------
    block_k = _round_up(block_k, 128)
    block_b = _round_up(block_b, 16)
    hp = _round_up(H, 128)

    din128 = _round_up(Din, 128)
    nk = pl.cdiv(din128, block_k)                    # number of K steps
    bk = _round_up(pl.cdiv(din128, nk), 128)         # din_pad / bk is an integer
    din_pad = bk * nk

    b_ceil = _round_up(B, 16)                        # bf16 sublane tile is 16 rows
    bb = min(block_b, b_ceil)
    if b_ceil >= 32:                                 # keep >= 2 batch blocks so the
        bb = min(bb, _round_up(b_ceil // 2, 16))     # "parallel" axis feeds both v7x TCs
    b_pad = _round_up(B, bb)
    nb = b_pad // bb

    def pad2(x, r, c):
        return jnp.pad(x, ((0, r - x.shape[0]), (0, c - x.shape[1])))

    fake_p = pad2(fake, b_pad, din_pad)
    real_p = pad2(real, b_pad, din_pad)
    # Interleave fake/real per batch block -> one (2*b_pad, Din) slab so each
    # K step is a single (2*bb, bk) x (bk, H) dot (fills the 256-row MXU).
    x2 = jnp.concatenate(
        [fake_p.reshape(nb, bb, din_pad), real_p.reshape(nb, bb, din_pad)],
        axis=1).reshape(2 * b_pad, din_pad)

    w1_p = pad2(w1b, din_pad, hp)                    # zero rows/cols: no effect
    # Hoisted Gram  G = W1^T W1  (bf16 operands, f32 accumulation): one XLA
    # matmul instead of nb redundant in-kernel accumulations.
    gram = lax.dot_general(w1_p, w1_p, (((0,), (0,)), ((), ())),
                           preferred_element_type=jnp.float32)     # (hp, hp)

    alpha_p = jnp.pad(alpha.astype(jnp.float32), ((0, b_pad - B), (0, 0)))
    b1_r = pad2(b1.reshape(1, H).astype(jnp.float32), 1, hp)
    w2_r = pad2(w2.reshape(1, H).astype(jnp.float32), 1, hp)
    b2_r = b2.reshape(1, 1).astype(jnp.float32)

    outf, outr, ss = pl.pallas_call(
        _fused_loss_kernel,
        out_shape=(jax.ShapeDtypeStruct((b_pad, 128), jnp.float32),) * 3,
        grid_spec=pltpu.PrefetchScalarGridSpec(
            num_scalar_prefetch=0,
            grid=(nb, nk),                                        # reduction axis last
            in_specs=[
                pl.BlockSpec((bb, 1), lambda b, k: (b, 0)),       # alpha
                pl.BlockSpec((2 * bb, bk), lambda b, k: (b, k)),  # fake|real slab
                # W1 VMEM-resident: constant block index -> HBM DMA once per core.
                pl.BlockSpec((din_pad, hp), lambda b, k: (0, 0)),
                pl.BlockSpec((hp, hp), lambda b, k: (0, 0)),      # hoisted Gram
                pl.BlockSpec((1, hp), lambda b, k: (0, 0)),       # b1
                pl.BlockSpec((1, hp), lambda b, k: (0, 0)),       # w2 row
                pl.BlockSpec(memory_space=pltpu.MemorySpace.SMEM),  # b2 scalar
            ],
            out_specs=(
                pl.BlockSpec((bb, 128), lambda b, k: (b, 0)),     # D(fake) per row
                pl.BlockSpec((bb, 128), lambda b, k: (b, 0)),     # D(real) per row
                pl.BlockSpec((bb, 128), lambda b, k: (b, 0)),     # ||grad||^2 per row
            ),
            scratch_shapes=[
                pltpu.VMEM((2 * bb, hp), jnp.float32),            # fused z accumulator
            ],
        ),
        compiler_params=pltpu.CompilerParams(
            dimension_semantics=("parallel", "arbitrary"),
            vmem_limit_bytes=_vmem_limit_bytes(),
        ),
    )(alpha_p, x2, w1_p, gram, b1_r, w2_r, b2_r)

    out_f = outf[:B, 0]
    out_r = outr[:B, 0]
    row_ss = ss[:B, 0]

    adv_d_loss = jnp.mean(out_f) - jnp.mean(out_r)
    # torch.norm(dxdD, p=2) is the GLOBAL Frobenius norm (scalar), so
    # mean((norm - 1)^2) == (norm - 1)^2.
    grad_norm = jnp.sqrt(jnp.sum(row_ss))
    gp_loss = (grad_norm - 1.0) ** 2
    return adv_d_loss + 10.0 * gp_loss


# ---------------------------------------------------------------------------
# Pure-JAX reference (same bf16 rounding of streamed operands) for correctness.
# ---------------------------------------------------------------------------
def _reference_loss(params, img_fake, img_real, alpha):
    w1, b1, w2, b2 = params
    B = img_fake.shape[0]
    Din = math.prod(img_fake.shape[1:])
    fake = img_fake.reshape(B, Din).astype(jnp.bfloat16).astype(jnp.float32)
    real = img_real.reshape(B, Din).astype(jnp.bfloat16).astype(jnp.float32)
    w1f = w1.astype(jnp.bfloat16).astype(jnp.float32)

    def d_fwd(x):
        z = x @ w1f + b1
        a = jnp.where(z > 0, z, LRELU_SLOPE * z)
        return a @ w2 + b2, z

    out_f, _ = d_fwd(fake)
    out_r, _ = d_fwd(real)
    adv = jnp.mean(out_f) - jnp.mean(out_r)

    interp = alpha * fake + (1.0 - alpha) * real
    _, zi = d_fwd(interp)
    mask = jnp.where(zi > 0, 1.0, LRELU_SLOPE)
    grad = (mask * w2.reshape(1, -1)) @ w1f.T                       # (B, Din)
    gnorm = jnp.sqrt(jnp.sum(grad * grad))
    return adv + 10.0 * (gnorm - 1.0) ** 2


if __name__ == "__main__":
    # Small, deterministic example shapes (stand-in for the 3x128x128 images).
    B, C, Hs, Ws = 2, 3, 16, 16
    Din, HID = C * Hs * Ws, 128

    key = jax.random.PRNGKey(0)
    k_fake, k_real, k_w1, k_w2, k_alpha = jax.random.split(key, 5)

    img128_fake = jax.random.normal(k_fake, (B, C, Hs, Ws), jnp.float32)
    img128_gt = jax.random.normal(k_real, (B, C, Hs, Ws), jnp.float32)

    # Deterministic synthetic discriminator parameters (2-layer MLP).
    w1 = 0.02 * jax.random.normal(k_w1, (Din, HID), jnp.float32)
    b1 = jnp.zeros((1, HID), jnp.float32)
    w2 = 0.02 * jax.random.normal(k_w2, (HID, 1), jnp.float32)
    b2 = jnp.zeros((1, 1), jnp.float32)
    params = (w1, b1, w2, b2)

    # alpha ~ U[0,1) per sample, same as torch.rand(B,1,1,1).expand_as(...).
    alpha = jax.random.uniform(k_alpha, (B, 1), jnp.float32)

    @jax.jit
    def run(p, f, r, a):
        # small K tile so the demo exercises the multi-step accumulate path
        return loss_discriminator(p, f, r, a, block_k=256, block_b=256)

    loss = run(params, img128_fake, img128_gt, alpha)
    jax.block_until_ready(loss)

    ref = _reference_loss(params, img128_fake, img128_gt, alpha)
    assert loss.shape == () and jnp.isfinite(loss)
    assert jnp.allclose(loss, ref, rtol=5e-2, atol=1e-3), (float(loss), float(ref))
    print("KERNEL_OK")
</pallas_src>

<mosaic_0001>
module attributes {stable_mosaic.version = 11 : i64} {
  func.func @_fused_loss_kernel(%arg0: i32, %arg1: i32, %arg2: memref<16x1xf32, #tpu.memory_space<vmem>>, %arg3: memref<32x256xbf16, #tpu.memory_space<vmem>>, %arg4: memref<768x128xbf16, #tpu.memory_space<vmem>>, %arg5: memref<128x128xf32, #tpu.memory_space<vmem>>, %arg6: memref<1x128xf32, #tpu.memory_space<vmem>>, %arg7: memref<1x128xf32, #tpu.memory_space<vmem>>, %arg8: memref<1x1xf32, #tpu.memory_space<smem>>, %arg9: memref<16x128xf32, #tpu.memory_space<vmem>>, %arg10: memref<16x128xf32, #tpu.memory_space<vmem>>, %arg11: memref<16x128xf32, #tpu.memory_space<vmem>>, %arg12: memref<32x128xf32, #tpu.memory_space<vmem>>) attributes {dimension_semantics = [#tpu.dimension_semantics<parallel>, #tpu.dimension_semantics<arbitrary>], iteration_bounds = array<i64: 1, 3>, scalar_prefetch = 0 : i64, scratch_operands = 1 : i64, tpu.core_type = #tpu.core_type<tc>, window_params = [{transform_indices = @transform_0, window_bounds = array<i64: 16, 1>}, {transform_indices = @transform_1, window_bounds = array<i64: 32, 256>}, {pipeline_mode = #tpu.pipeline_mode<synchronous>, transform_indices = @transform_2, window_bounds = array<i64: 768, 128>}, {pipeline_mode = #tpu.pipeline_mode<synchronous>, transform_indices = @transform_3, window_bounds = array<i64: 128, 128>}, {pipeline_mode = #tpu.pipeline_mode<synchronous>, transform_indices = @transform_4, window_bounds = array<i64: 1, 128>}, {pipeline_mode = #tpu.pipeline_mode<synchronous>, transform_indices = @transform_5, window_bounds = array<i64: 1, 128>}, {transform_indices = @transform_6, window_bounds = array<i64: 1, 1>}, {transform_indices = @transform_7, window_bounds = array<i64: 16, 128>}, {transform_indices = @transform_8, window_bounds = array<i64: 16, 128>}, {transform_indices = @transform_9, window_bounds = array<i64: 16, 128>}]} {
    %c0_i32 = arith.constant 0 : i32
    %0 = arith.cmpi eq, %arg1, %c0_i32 : i32
    %1 = arith.extui %0 : i1 to i32
    %c0_i32_0 = arith.constant 0 : i32
    %2 = arith.cmpi ne, %1, %c0_i32_0 : i32
    scf.if %2 {
      %cst_8 = arith.constant 0.000000e+00 : f32
      %15 = vector.broadcast %cst_8 : f32 to vector<32x128xf32>
      %c0_9 = arith.constant 0 : index
      %c0_10 = arith.constant 0 : index
      %16 = vector.load %arg12[%c0_9, %c0_10] : memref<32x128xf32, #tpu.memory_space<vmem>>, vector<32x128xf32>
      tpu.vector_store %arg12[%c0_9, %c0_10], %15 {strides = array<i32>} : memref<32x128xf32, #tpu.memory_space<vmem>>, vector<32x128xf32>,
    } else {
    }
    %c256_i32 = arith.constant 256 : i32
    %3 = arith.muli %arg1, %c256_i32 : i32
    %4 = tpu.assume_multiple %3, 128 : i32
    %5 = arith.index_cast %4 : i32 to index
    %c0 = arith.constant 0 : index
    %6 = vector.load %arg4[%5, %c0] : memref<768x128xbf16, #tpu.memory_space<vmem>>, vector<256x128xbf16>
    %c0_1 = arith.constant 0 : index
    %c0_2 = arith.constant 0 : index
    %7 = vector.load %arg12[%c0_1, %c0_2] : memref<32x128xf32, #tpu.memory_space<vmem>>, vector<32x128xf32>
    %c0_3 = arith.constant 0 : index
    %c0_4 = arith.constant 0 : index
    %8 = vector.load %arg3[%c0_3, %c0_4] : memref<32x256xbf16, #tpu.memory_space<vmem>>, vector<32x256xbf16>
    %cst = arith.constant dense<0.000000e+00> : vector<32x128xf32>
    %9 = tpu.matmul %8, %6, %cst {dimension_numbers = #tpu.dot_dimension_numbers<[1], [0], [0], [1], [0, 0, 1, 1], [], []>} : vector<32x256xbf16>, vector<256x128xbf16>, vector<32x128xf32> -> vector<32x128xf32>
    %10 = arith.addf %7, %9 : vector<32x128xf32>
    %c0_5 = arith.constant 0 : index
    %c0_6 = arith.constant 0 : index
    %11 = vector.load %arg12[%c0_5, %c0_6] : memref<32x128xf32, #tpu.memory_space<vmem>>, vector<32x128xf32>
    tpu.vector_store %arg12[%c0_5, %c0_6], %10 {strides = array<i32>} : memref<32x128xf32, #tpu.memory_space<vmem>>, vector<32x128xf32>,
    %c2_i32 = arith.constant 2 : i32
    %12 = arith.cmpi eq, %arg1, %c2_i32 : i32
    %13 = arith.extui %12 : i1 to i32
    %c0_i32_7 = arith.constant 0 : i32
    %14 = arith.cmpi ne, %13, %c0_i32_7 : i32
    scf.if %14 {
      %c0_8 = arith.constant 0 : index
      %c0_9 = arith.constant 0 : index
      %15 = vector.load %arg6[%c0_8, %c0_9] : memref<1x128xf32, #tpu.memory_space<vmem>>, vector<1x128xf32>
      %c0_10 = arith.constant 0 : index
      %c0_11 = arith.constant 0 : index
      %16 = vector.load %arg7[%c0_10, %c0_11] : memref<1x128xf32, #tpu.memory_space<vmem>>, vector<1x128xf32>
      %c0_12 = arith.constant 0 : index
      %c0_13 = arith.constant 0 : index
      %17 = memref.load %arg8[%c0_12, %c0_13] : memref<1x1xf32, #tpu.memory_space<smem>>
      %c0_14 = arith.constant 0 : index
      %c0_15 = arith.constant 0 : index
      %18 = vector.load %arg2[%c0_14, %c0_15] : memref<16x1xf32, #tpu.memory_space<vmem>>, vector<16x1xf32>
      %c0_16 = arith.constant 0 : index
      %c0_17 = arith.constant 0 : index
      %19 = vector.load %arg12[%c0_16, %c0_17] : memref<32x128xf32, #tpu.memory_space<vmem>>, vector<32x128xf32>
      %20 = vector.broadcast %15 : vector<1x128xf32> to vector<32x128xf32>
      %21 = arith.addf %19, %20 : vector<32x128xf32>
      %22 = vector.extract_strided_slice %21 {offsets = [0, 0], sizes = [16, 128], strides = [1, 1]} : vector<32x128xf32> to vector<16x128xf32>
      %23 = vector.extract_strided_slice %21 {offsets = [16, 0], sizes = [16, 128], strides = [1, 1]} : vector<32x128xf32> to vector<16x128xf32>
      %24 = vector.broadcast %18 : vector<16x1xf32> to vector<16x128xf32>
      %25 = arith.mulf %24, %22 : vector<16x128xf32>
      %cst_18 = arith.constant 1.000000e+00 : f32
      %26 = vector.broadcast %cst_18 : f32 to vector<16x1xf32>
      %27 = arith.subf %26, %18 : vector<16x1xf32>
      %28 = vector.broadcast %27 : vector<16x1xf32> to vector<16x128xf32>
      %29 = arith.mulf %28, %23 : vector<16x128xf32>
      %30 = arith.addf %25, %29 : vector<16x128xf32>
      %cst_19 = arith.constant 0.000000e+00 : f32
      %31 = vector.broadcast %cst_19 : f32 to vector<16x128xf32>
      %32 = arith.cmpf ogt, %22, %31 : vector<16x128xf32>
      %cst_20 = arith.constant 2.000000e-01 : f32
      %33 = vector.broadcast %cst_20 : f32 to vector<16x128xf32>
      %34 = arith.mulf %33, %22 : vector<16x128xf32>
      %35 = arith.select %32, %22, %34 : vector<16x128xi1>, vector<16x128xf32>
      %cst_21 = arith.constant 0.000000e+00 : f32
      %36 = vector.broadcast %cst_21 : f32 to vector<16x128xf32>
      %37 = arith.cmpf ogt, %23, %36 : vector<16x128xf32>
      %cst_22 = arith.constant 2.000000e-01 : f32
      %38 = vector.broadcast %cst_22 : f32 to vector<16x128xf32>
      %39 = arith.mulf %38, %23 : vector<16x128xf32>
      %40 = arith.select %37, %23, %39 : vector<16x128xi1>, vector<16x128xf32>
      %41 = vector.broadcast %16 : vector<1x128xf32> to vector<16x128xf32>
      %42 = arith.mulf %35, %41 : vector<16x128xf32>
      %cst_23 = arith.constant dense<0.000000e+00> : vector<16xf32>
      %43 = vector.multi_reduction <add>, %42, %cst_23 [1] : vector<16x128xf32> to vector<16xf32>
      %44 = vector.shape_cast %43 : vector<16xf32> to vector<16x1xf32>
      %45 = vector.broadcast %17 : f32 to vector<16x1xf32>
      %46 = arith.addf %44, %45 : vector<16x1xf32>
      %47 = vector.broadcast %16 : vector<1x128xf32> to vector<16x128xf32>
      %48 = arith.mulf %40, %47 : vector<16x128xf32>
      %cst_24 = arith.constant dense<0.000000e+00> : vector<16xf32>
      %49 = vector.multi_reduction <add>, %48, %cst_24 [1] : vector<16x128xf32> to vector<16xf32>
      %50 = vector.shape_cast %49 : vector<16xf32> to vector<16x1xf32>
      %51 = vector.broadcast %17 : f32 to vector<16x1xf32>
      %52 = arith.addf %50, %51 : vector<16x1xf32>
      %cst_25 = arith.constant 0.000000e+00 : f32
      %53 = vector.broadcast %cst_25 : f32 to vector<16x128xf32>
      %54 = arith.cmpf ogt, %30, %53 : vector<16x128xf32>
      %cst_26 = arith.constant 1.000000e+00 : f32
      %cst_27 = arith.constant 2.000000e-01 : f32
      %55 = vector.broadcast %cst_26 : f32 to vector<16x128xf32>
      %56 = vector.broadcast %cst_27 : f32 to vector<16x128xf32>
      %57 = arith.select %54, %55, %56 : vector<16x128xi1>, vector<16x128xf32>
      %58 = vector.broadcast %16 : vector<1x128xf32> to vector<16x128xf32>
      %59 = arith.mulf %57, %58 : vector<16x128xf32>
      %c0_28 = arith.constant 0 : index
      %c0_29 = arith.constant 0 : index
      %60 = vector.load %arg5[%c0_28, %c0_29] : memref<128x128xf32, #tpu.memory_space<vmem>>, vector<128x128xf32>
      %cst_30 = arith.constant dense<0.000000e+00> : vector<16x128xf32>
      %61 = tpu.matmul %59, %60, %cst_30 {dimension_numbers = #tpu.dot_dimension_numbers<[1], [0], [0], [1], [0, 0, 1, 1], [], []>} : vector<16x128xf32>, vector<128x128xf32>, vector<16x128xf32> -> vector<16x128xf32>
      %62 = arith.mulf %61, %59 : vector<16x128xf32>
      %cst_31 = arith.constant dense<0.000000e+00> : vector<16xf32>
      %63 = vector.multi_reduction <add>, %62, %cst_31 [1] : vector<16x128xf32> to vector<16xf32>
      %64 = vector.shape_cast %63 : vector<16xf32> to vector<16x1xf32>
      %65 = vector.shape_cast %46 : vector<16x1xf32> to vector<16x1xf32>
      %66 = vector.broadcast %65 : vector<16x1xf32> to vector<16x128xf32>
      %c0_32 = arith.constant 0 : index
      %c0_33 = arith.constant 0 : index
      %67 = vector.load %arg9[%c0_32, %c0_33] : memref<16x128xf32, #tpu.memory_space<vmem>>, vector<16x128xf32>
      tpu.vector_store %arg9[%c0_32, %c0_33], %66 {strides = array<i32>} : memref<16x128xf32, #tpu.memory_space<vmem>>, vector<16x128xf32>,
      %68 = vector.shape_cast %52 : vector<16x1xf32> to vector<16x1xf32>
      %69 = vector.broadcast %68 : vector<16x1xf32> to vector<16x128xf32>
      %c0_34 = arith.constant 0 : index
      %c0_35 = arith.constant 0 : index
      %70 = vector.load %arg10[%c0_34, %c0_35] : memref<16x128xf32, #tpu.memory_space<vmem>>, vector<16x128xf32>
      tpu.vector_store %arg10[%c0_34, %c0_35], %69 {strides = array<i32>} : memref<16x128xf32, #tpu.memory_space<vmem>>, vector<16x128xf32>,
      %71 = vector.shape_cast %64 : vector<16x1xf32> to vector<16x1xf32>
      %72 = vector.broadcast %71 : vector<16x1xf32> to vector<16x128xf32>
      %c0_36 = arith.constant 0 : index
      %c0_37 = arith.constant 0 : index
      %73 = vector.load %arg11[%c0_36, %c0_37] : memref<16x128xf32, #tpu.memory_space<vmem>>, vector<16x128xf32>
      tpu.vector_store %arg11[%c0_36, %c0_37], %72 {strides = array<i32>} : memref<16x128xf32, #tpu.memory_space<vmem>>, vector<16x128xf32>,
    } else {
    }
    return
  }
  func.func @transform_0(%arg0: i32, %arg1: i32) -> (i32, i32) {
    %c0_i32 = arith.constant 0 : i32
    %c0_i32_0 = arith.constant 0 : i32
    return %arg0, %c0_i32 : i32, i32
  }
  func.func @transform_1(%arg0: i32, %arg1: i32) -> (i32, i32) {
    %c0_i32 = arith.constant 0 : i32
    return %arg0, %arg1 : i32, i32
  }
  func.func @transform_2(%arg0: i32, %arg1: i32) -> (i32, i32) {
    %c0_i32 = arith.constant 0 : i32
    %c0_i32_0 = arith.constant 0 : i32
    %c0_i32_1 = arith.constant 0 : i32
    return %c0_i32, %c0_i32_0 : i32, i32
  }
  func.func @transform_3(%arg0: i32, %arg1: i32) -> (i32, i32) {
    %c0_i32 = arith.constant 0 : i32
    %c0_i32_0 = arith.constant 0 : i32
    %c0_i32_1 = arith.constant 0 : i32
    return %c0_i32, %c0_i32_0 : i32, i32
  }
  func.func @transform_4(%arg0: i32, %arg1: i32) -> (i32, i32) {
    %c0_i32 = arith.constant 0 : i32
    %c0_i32_0 = arith.constant 0 : i32
    %c0_i32_1 = arith.constant 0 : i32
    return %c0_i32, %c0_i32_0 : i32, i32
  }
  func.func @transform_5(%arg0: i32, %arg1: i32) -> (i32, i32) {
    %c0_i32 = arith.constant 0 : i32
    %c0_i32_0 = arith.constant 0 : i32
    %c0_i32_1 = arith.constant 0 : i32
    return %c0_i32, %c0_i32_0 : i32, i32
  }
  func.func @transform_6(%arg0: i32, %arg1: i32) -> (i32, i32) {
    %c0_i32 = arith.constant 0 : i32
    %c0_i32_0 = arith.constant 0 : i32
    %c0_i32_1 = arith.constant 0 : i32
    return %c0_i32, %c0_i32_0 : i32, i32
  }
  func.func @transform_7(%arg0: i32, %arg1: i32) -> (i32, i32) {
    %c0_i32 = arith.constant 0 : i32
    %c0_i32_0 = arith.constant 0 : i32
    return %arg0, %c0_i32 : i32, i32
  }
  func.func @transform_8(%arg0: i32, %arg1: i32) -> (i32, i32) {
    %c0_i32 = arith.constant 0 : i32
    %c0_i32_0 = arith.constant 0 : i32
    return %arg0, %c0_i32 : i32, i32
  }
  func.func @transform_9(%arg0: i32, %arg1: i32) -> (i32, i32) {
    %c0_i32 = arith.constant 0 : i32
    %c0_i32_0 = arith.constant 0 : i32
    return %arg0, %c0_i32 : i32, i32
  }
}

</mosaic_0001>

<llo_original>
// kernel: run.1
$region0: #{run.1}
  #allocation0 [shape = 'u32[]', space=smem, size = 0x4, offset = 0x4, fixed_abs, tag = 'smem constant byte address 0x4 - core index']
  #allocation1 [shape = 'u32[144,128]{1,0:T(1,128)}', space=vmem, size = 0x12000, scoped, tag = 'internal scratch']
  #allocation2 [shape = 'f32[32,128]{1,0:T(8,128)}', space=vmem, size = 0x4000, scoped, tag = 'scratch operand']
  #allocation3 [shape = 'f32[1,1]{1,0:T(1,128)S(6)}', space=smem, size = 0x200, scoped, tag = 'scoped memory for run.1']
  %s0 = inlined_call_operand.vmem [shape: f32[16,1], index: 0, kind: input, shape index: {}]
  %s1 = inlined_call_operand.vmem [shape: bf16[32,768], index: 1, kind: input, shape index: {}]
  %s2 = inlined_call_operand.vmem [shape: bf16[768,128], index: 2, kind: input, shape index: {}]
  %s3 = inlined_call_operand.vmem [shape: f32[128,128], index: 3, kind: input, shape index: {}]
  %s4 = inlined_call_operand.vmem [shape: f32[1,128], index: 4, kind: input, shape index: {}]
  %s5 = inlined_call_operand.vmem [shape: f32[1,128], index: 5, kind: input, shape index: {}]
  %s6 = inlined_call_operand.<no memory space> [shape: f32[1,1], index: 6, kind: input, shape index: {}]
  %s7 = inlined_call_operand.vmem [shape: f32[16,128], index: 7, kind: output, shape index: {0}]
  %s8 = inlined_call_operand.vmem [shape: f32[16,128], index: 8, kind: output, shape index: {1}]
  %s9 = inlined_call_operand.vmem [shape: f32[16,128], index: 9, kind: output, shape index: {2}]
  %10 = xla_tuple %s7, %s8, %s9
  %s11 = sld [smem:[#allocation0]]
  $region123: #{run.1} parent=0
    _
  %s13 = ssub.s32 1, %s11
  %s14 = scalar_select 0, %s13, %s11
  %15 = sst [smem:[#allocation3]] %s6
  $region1: #{run.1} parent=0
    #allocation4 [shape = 'u8[32768]{0}', space=vmem, size = 0x8000, scoped, tag = 'input window, operand 1']
    loop: start=0, step=1, limit=5
    $region2: #{run.1} parent=1 // loop_pre_header
      _
    $region3: #{run.1} parent=1 // loop_header
      %s17 = sphi 0, %s21
      %p18 = scmp.ge.s32.totalorder %s17, 5
      %s24 = sphi 0, %s36
      %s25 = sphi 0, %s32
      %s26 = sphi 0, %s24
      %s27 = sphi 0, %s25
      %s28 = sphi 0, %s26
      %s29 = sphi 0, %s27
      %s39 = sphi 0, %s41
      %s42 = sphi 0, %s39
      %s43 = sphi 0, %s42
      %s59 = sphi 0, %s43
      %s67 = sphi 0, %s69
      %s70 = sphi 0, %s67
      %s71 = sphi 0, %s70
      %s87 = sphi 0, %s71
      %s91 = sphi 0, %s91
      %s93 = sphi 0, %s91
      %s94 = sphi 0, %s93
      %s108 = sphi 0, %s94
      %s112 = sphi 0, %s112
      %s114 = sphi 0, %s112
      %s115 = sphi 0, %s114
      %s129 = sphi 0, %s115
      %s133 = sphi 0, %s133
      %s135 = sphi 0, %s133
      %s136 = sphi 0, %s135
      %s150 = sphi 0, %s136
      %s154 = sphi 0, %s154
      %s156 = sphi 0, %s154
      %s157 = sphi 0, %s156
      %s171 = sphi 0, %s157
      %s175 = sphi 0, %s175
      %s177 = sphi 0, %s175
      %s178 = sphi 0, %s177
      %s192 = sphi 0, %s178
      %s198 = sphi 0, %s200
      %s201 = sphi 0, %s198
      %s202 = sphi 0, %s201
      %s218 = sphi 0, %s202
      %s224 = sphi 0, %s226
      %s227 = sphi 0, %s224
      %s228 = sphi 0, %s227
      %s244 = sphi 0, %s228
      %s250 = sphi 0, %s252
      %s253 = sphi 0, %s250
      %s254 = sphi 0, %s253
      %s270 = sphi 0, %s254
    $region4: #{run.1} parent=1 // loop_header_branch
      %20 = sbr.rel (%p18) target = $region8
    $region5: #{run.1} parent=1 // loop_body
      %s22 = ssub.s32 %s17, 1
      %s23 = ssub.s32 %s17, 2
      %s30 = sadd.s32 1, %s25
      %p31 = scmp.ge.s32.totalorder %s30, 3
      %s32 = scalar_select %p31, 0, %s30
      %s33 = sadd.s32 1, %s24
      %s34 = scalar_select %p31, %s33, %s24
      %p35 = scmp.ge.s32.totalorder %s34, 1
      %s36 = scalar_select %p35, 0, %s34
      %s37 = ssub.s32 %s24, %s36
      %p38 = scmp.eq.s32.totalorder %s37, 0
      %s40 = sadd.s32 %s39, 1
      %s41 = scalar_select %p38, %s39, %s40
      %p44 = pneg %p38
      %p45 = scmp.eq.s32.totalorder %s17, 2
      %p46 = por %p44, %p45
      %p47 = scmp.ne.s32.totalorder %s39, %s42
      %p48 = scmp.eq.s32.totalorder %s17, 0
      %p49 = por %p47, %p48
      %p50 = scmp.ne.s32.totalorder %s39, %s42
      %p51 = scmp.eq.s32.totalorder %s22, 2
      %p52 = por %p50, %p51
      %p53 = scmp.ne.s32.totalorder %s42, %s43
      %p54 = scmp.eq.s32.totalorder %s22, 0
      %p55 = por %p53, %p54
      %p56 = scmp.ne.s32.totalorder %s42, %s43
      %p57 = scmp.eq.s32.totalorder %s23, 2
      %p58 = por %p56, %p57
      %p60 = scmp.ne.s32.totalorder %s43, %s59
      %p61 = scmp.eq.s32.totalorder %s23, 0
      %p62 = por %p60, %p61
      %s63 = ssub.s32 %s24, %s36
      %s64 = ssub.s32 %s25, %s32
      %s65 = sor.u32 %s63, %s64
      %p66 = scmp.eq.s32.totalorder %s65, 0
      %s68 = sadd.s32 %s67, 1
      %s69 = scalar_select %p66, %s67, %s68
      %p72 = pneg %p66
      %p73 = scmp.eq.s32.totalorder %s17, 2
      %p74 = por %p72, %p73
      %p75 = scmp.ne.s32.totalorder %s67, %s70
      %p76 = scmp.eq.s32.totalorder %s17, 0
      %p77 = por %p75, %p76
      %p78 = scmp.ne.s32.totalorder %s67, %s70
      %p79 = scmp.eq.s32.totalorder %s22, 2
      %p80 = por %p78, %p79
      %p81 = scmp.ne.s32.totalorder %s70, %s71
      %p82 = scmp.eq.s32.totalorder %s22, 0
      %p83 = por %p81, %p82
      %p84 = scmp.ne.s32.totalorder %s70, %s71
      %p85 = scmp.eq.s32.totalorder %s23, 2
      %p86 = por %p84, %p85
      %p88 = scmp.ne.s32.totalorder %s71, %s87
      %p89 = scmp.eq.s32.totalorder %s23, 0
      %p90 = por %p88, %p89
      %s92 = sadd.s32 %s91, 1
      %p95 = scmp.eq.s32.totalorder %s17, 2
      %p96 = scmp.ne.s32.totalorder %s91, %s93
      %p97 = scmp.eq.s32.totalorder %s17, 0
      %p98 = por %p96, %p97
      %p99 = scmp.ne.s32.totalorder %s91, %s93
      %p100 = scmp.eq.s32.totalorder %s22, 2
      %p101 = por %p99, %p100
      %p102 = scmp.ne.s32.totalorder %s93, %s94
      %p103 = scmp.eq.s32.totalorder %s22, 0
      %p104 = por %p102, %p103
      %p105 = scmp.ne.s32.totalorder %s93, %s94
      %p106 = scmp.eq.s32.totalorder %s23, 2
      %p107 = por %p105, %p106
      %p109 = scmp.ne.s32.totalorder %s94, %s108
      %p110 = scmp.eq.s32.totalorder %s23, 0
      %p111 = por %p109, %p110
      %s113 = sadd.s32 %s112, 1
      %p116 = scmp.eq.s32.totalorder %s17, 2
      %p117 = scmp.ne.s32.totalorder %s112, %s114
      %p118 = scmp.eq.s32.totalorder %s17, 0
      %p119 = por %p117, %p118
      %p120 = scmp.ne.s32.totalorder %s112, %s114
      %p121 = scmp.eq.s32.totalorder %s22, 2
      %p122 = por %p120, %p121
      %p123 = scmp.ne.s32.totalorder %s114, %s115
      %p124 = scmp.eq.s32.totalorder %s22, 0
      %p125 = por %p123, %p124
      %p126 = scmp.ne.s32.totalorder %s114, %s115
      %p127 = scmp.eq.s32.totalorder %s23, 2
      %p128 = por %p126, %p127
      %p130 = scmp.ne.s32.totalorder %s115, %s129
      %p131 = scmp.eq.s32.totalorder %s23, 0
      %p132 = por %p130, %p131
      %s134 = sadd.s32 %s133, 1
      %p137 = scmp.eq.s32.totalorder %s17, 2
      %p138 = scmp.ne.s32.totalorder %s133, %s135
      %p139 = scmp.eq.s32.totalorder %s17, 0
      %p140 = por %p138, %p139
      %p141 = scmp.ne.s32.totalorder %s133, %s135
      %p142 = scmp.eq.s32.totalorder %s22, 2
      %p143 = por %p141, %p142
      %p144 = scmp.ne.s32.totalorder %s135, %s136
      %p145 = scmp.eq.s32.totalorder %s22, 0
      %p146 = por %p144, %p145
      %p147 = scmp.ne.s32.totalorder %s135, %s136
      %p148 = scmp.eq.s32.totalorder %s23, 2
      %p149 = por %p147, %p148
      %p151 = scmp.ne.s32.totalorder %s136, %s150
      %p152 = scmp.eq.s32.totalorder %s23, 0
      %p153 = por %p151, %p152
      %s155 = sadd.s32 %s154, 1
      %p158 = scmp.eq.s32.totalorder %s17, 2
      %p159 = scmp.ne.s32.totalorder %s154, %s156
      %p160 = scmp.eq.s32.totalorder %s17, 0
      %p161 = por %p159, %p160
      %p162 = scmp.ne.s32.totalorder %s154, %s156
      %p163 = scmp.eq.s32.totalorder %s22, 2
      %p164 = por %p162, %p163
      %p165 = scmp.ne.s32.totalorder %s156, %s157
      %p166 = scmp.eq.s32.totalorder %s22, 0
      %p167 = por %p165, %p166
      %p168 = scmp.ne.s32.totalorder %s156, %s157
      %p169 = scmp.eq.s32.totalorder %s23, 2
      %p170 = por %p168, %p169
      %p172 = scmp.ne.s32.totalorder %s157, %s171
      %p173 = scmp.eq.s32.totalorder %s23, 0
      %p174 = por %p172, %p173
      %s176 = sadd.s32 %s175, 1
      %p179 = scmp.eq.s32.totalorder %s17, 2
      %p180 = scmp.ne.s32.totalorder %s175, %s177
      %p181 = scmp.eq.s32.totalorder %s17, 0
      %p182 = por %p180, %p181
      %p183 = scmp.ne.s32.totalorder %s175, %s177
      %p184 = scmp.eq.s32.totalorder %s22, 2
      %p185 = por %p183, %p184
      %p186 = scmp.ne.s32.totalorder %s177, %s178
      %p187 = scmp.eq.s32.totalorder %s22, 0
      %p188 = por %p186, %p187
      %p189 = scmp.ne.s32.totalorder %s177, %s178
      %p190 = scmp.eq.s32.totalorder %s23, 2
      %p191 = por %p189, %p190
      %p193 = scmp.ne.s32.totalorder %s178, %s192
      %p194 = scmp.eq.s32.totalorder %s23, 0
      %p195 = por %p193, %p194
      %s196 = ssub.s32 %s24, %s36
      %p197 = scmp.eq.s32.totalorder %s196, 0
      %s199 = sadd.s32 %s198, 1
      %s200 = scalar_select %p197, %s198, %s199
      %p203 = pneg %p197
      %p204 = scmp.eq.s32.totalorder %s17, 2
      %p205 = por %p203, %p204
      %p206 = scmp.ne.s32.totalorder %s198, %s201
      %p207 = scmp.eq.s32.totalorder %s17, 0
      %p208 = por %p206, %p207
      %p209 = scmp.ne.s32.totalorder %s198, %s201
      %p210 = scmp.eq.s32.totalorder %s22, 2
      %p211 = por %p209, %p210
      %p212 = scmp.ne.s32.totalorder %s201, %s202
      %p213 = scmp.eq.s32.totalorder %s22, 0
      %p214 = por %p212, %p213
      %p215 = scmp.ne.s32.totalorder %s201, %s202
      %p216 = scmp.eq.s32.totalorder %s23, 2
      %p217 = por %p215, %p216
      %p219 = scmp.ne.s32.totalorder %s202, %s218
      %p220 = scmp.eq.s32.totalorder %s23, 0
      %p221 = por %p219, %p220
      %s222 = ssub.s32 %s24, %s36
      %p223 = scmp.eq.s32.totalorder %s222, 0
      %s225 = sadd.s32 %s224, 1
      %s226 = scalar_select %p223, %s224, %s225
      %p229 = pneg %p223
      %p230 = scmp.eq.s32.totalorder %s17, 2
      %p231 = por %p229, %p230
      %p232 = scmp.ne.s32.totalorder %s224, %s227
      %p233 = scmp.eq.s32.totalorder %s17, 0
      %p234 = por %p232, %p233
      %p235 = scmp.ne.s32.totalorder %s224, %s227
      %p236 = scmp.eq.s32.totalorder %s22, 2
      %p237 = por %p235, %p236
      %p238 = scmp.ne.s32.totalorder %s227, %s228
      %p239 = scmp.eq.s32.totalorder %s22, 0
      %p240 = por %p238, %p239
      %p241 = scmp.ne.s32.totalorder %s227, %s228
      %p242 = scmp.eq.s32.totalorder %s23, 2
      %p243 = por %p241, %p242
      %p245 = scmp.ne.s32.totalorder %s228, %s244
      %p246 = scmp.eq.s32.totalorder %s23, 0
      %p247 = por %p245, %p246
      %s248 = ssub.s32 %s24, %s36
      %p249 = scmp.eq.s32.totalorder %s248, 0
      %s251 = sadd.s32 %s250, 1
      %s252 = scalar_select %p249, %s250, %s251
      %p255 = pneg %p249
      %p256 = scmp.eq.s32.totalorder %s17, 2
      %p257 = por %p255, %p256
      %p258 = scmp.ne.s32.totalorder %s250, %s253
      %p259 = scmp.eq.s32.totalorder %s17, 0
      %p260 = por %p258, %p259
      %p261 = scmp.ne.s32.totalorder %s250, %s253
      %p262 = scmp.eq.s32.totalorder %s22, 2
      %p263 = por %p261, %p262
      %p264 = scmp.ne.s32.totalorder %s253, %s254
      %p265 = scmp.eq.s32.totalorder %s22, 0
      %p266 = por %p264, %p265
      %p267 = scmp.ne.s32.totalorder %s253, %s254
      %p268 = scmp.eq.s32.totalorder %s23, 2
      %p269 = por %p267, %p268
      %p271 = scmp.ne.s32.totalorder %s254, %s270
      %p272 = scmp.eq.s32.totalorder %s23, 0
      %p273 = por %p271, %p272
      %p274 = scmp.le.s32.totalorder 1, %s17
      %p275 = scmp.lt.s32.totalorder %s17, 4
      %p276 = pnand %p274, %p275
      %p277 = pneg %p276
      // Predicated region
      $region9: #{run.1} parent=5 // pred_check
        _
      $region10: #{run.1} parent=5 // pred_check_branch
        %279 = sbr.rel (%p276) target = $region12
      $region11: #{run.1} parent=5 // pred_region
        %s280 = ssub.s32 %s17, 1
        // Predicated region
        $region13: #{run.1} parent=11 // pred_check
          %p281 = pneg %p55
        $region14: #{run.1} parent=11 // pred_check_branch
          %283 = sbr.rel (%p281) target = $region16
        $region15: #{run.1} parent=11 // pred_region
          %s284 = smul.u32 2, %s26
          %p285 = scmp.lt.s32.totalorder %s284, 1
          %s286 = scalar_select %p285, %s284, 1
          %s287 = smul.addr %s286, 8
          %s288 = scalar_lea.vmem %s0, %s287
          %s289 = smul.u32 2, %s26
        $region16: #{run.1} parent=11 // pred_fallthru
          _
        // Predicated region
        $region17: #{run.1} parent=11 // pred_check
          %p290 = pneg %p104
        $region18: #{run.1} parent=11 // pred_check_branch
          %292 = sbr.rel (%p290) target = $region20
        $region19: #{run.1} parent=11 // pred_region
          _
        $region20: #{run.1} parent=11 // pred_fallthru
          _
        // Predicated region
        $region21: #{run.1} parent=11 // pred_check
          %p293 = pneg %p125
        $region22: #{run.1} parent=11 // pred_check_branch
          %295 = sbr.rel (%p293) target = $region24
        $region23: #{run.1} parent=11 // pred_region
          _
        $region24: #{run.1} parent=11 // pred_fallthru
          _
        // Predicated region
        $region25: #{run.1} parent=11 // pred_check
          %p296 = pneg %p146
        $region26: #{run.1} parent=11 // pred_check_branch
          %298 = sbr.rel (%p296) target = $region28
        $region27: #{run.1} parent=11 // pred_region
          _
        $region28: #{run.1} parent=11 // pred_fallthru
          _
        // Predicated region
        $region29: #{run.1} parent=11 // pred_check
          %p299 = pneg %p167
        $region30: #{run.1} parent=11 // pred_check_branch
          %301 = sbr.rel (%p299) target = $region32
        $region31: #{run.1} parent=11 // pred_region
          _
        $region32: #{run.1} parent=11 // pred_fallthru
          _
        // Predicated region
        $region33: #{run.1} parent=11 // pred_check
          %p302 = pneg %p188
        $region34: #{run.1} parent=11 // pred_check_branch
          %304 = sbr.rel (%p302) target = $region36
        $region35: #{run.1} parent=11 // pred_region
          _
        $region36: #{run.1} parent=11 // pred_fallthru
          _
      $region12: #{run.1} parent=5 // pred_fallthru
        _
      %p305 = scmp.lt.s32.totalorder %s17, 3
      // Predicated region
      $region37: #{run.1} parent=5 // pred_check
        %p306 = pneg %p305
      $region38: #{run.1} parent=5 // pred_check_branch
        %308 = sbr.rel (%p306) target = $region40
      $region39: #{run.1} parent=5 // pred_region
        // Predicated region
        $region41: #{run.1} parent=39 // pred_check
          %p309 = pneg %p77
        $region42: #{run.1} parent=39 // pred_check_branch
          %311 = sbr.rel (%p309) target = $region44
        $region43: #{run.1} parent=39 // pred_region
          %s312 = sand.u32 %s67, 1
          %s313 = sand.u32 %s67, 1
          %s314 = smul.addr %s313, 32
          %s315 = scalar_lea.vmem [#allocation4], %s314
          %s316 = smul.u32 4, %s24
          %s317 = smul.u32 2, %s25
          %s318 = smul.addr %s316, 6
          %s319 = sadd.s32 %s317, %s318
          %s320 = smul.addr %s319, 4
          %s321 = scalar_lea.vmem %s1, %s320
          // Predicated region
          $region45: #{run.1} parent=43 // pred_check
            _
          $region46: #{run.1} parent=43 // pred_check_branch
            %323 = sbr.rel (0) target = $region48
          $region47: #{run.1} parent=43 // pred_region
            // Predicated region
            $region49: #{run.1} parent=47 // pred_check
              _
            $region50: #{run.1} parent=47 // pred_check_branch
              %325 = sbr.rel (0) target = $region52
            $region51: #{run.1} parent=47 // pred_region
              // Predicated region
              $region64: #{run.1} parent=51 // pred_check
                _
              $region65: #{run.1} parent=51 // pred_check_branch
                %346 = sbr.rel (0) target = $region67
              $region66: #{run.1} parent=51 // pred_region
                loop: start=0, step=1, limit=1
                $region68: #{run.1} parent=66 // loop_pre_header
                  _
                $region69: #{run.1} parent=66 // loop_header
                  %s348 = sphi 0, %s352
                  %p349 = scmp.ge.s32.totalorder %s348, 1
                  %s353 = sphi %s321, %s321
                  %s354 = sphi %s315, %s315
                $region70: #{run.1} parent=66 // loop_header_branch
                  %351 = sbr.rel (%p349) target = $region74
                $region71: #{run.1} parent=66 // loop_body
                  %v355 = vld [vmem:[%s353] sm:$0xff]
                  %356 = vst [vmem:[%s354] sm:$0xff] %v355
                  %v357 = vld [vmem:[%s353 + $0x18] sm:$0xff]
                  %358 = vst [vmem:[%s354 + $0x8] sm:$0xff] %v357
                  %v359 = vld [vmem:[%s353 + $0x30] sm:$0xff]
                  %360 = vst [vmem:[%s354 + $0x10] sm:$0xff] %v359
                  %v361 = vld [vmem:[%s353 + $0x48] sm:$0xff]
                  %362 = vst [vmem:[%s354 + $0x18] sm:$0xff] %v361
                $region72: #{run.1} parent=66 // loop_footer
                  %s352 = sadd.s32 1, %s348
                $region73: #{run.1} parent=66 // loop_footer_branch
                  %347 = sbr.rel target = $region69
                $region74: #{run.1} parent=66 // loop_exit
                  _
              $region67: #{run.1} parent=51 // pred_fallthru
                _
              // Predicated region
              $region75: #{run.1} parent=51 // pred_check
                _
              $region76: #{run.1} parent=51 // pred_check_branch
                %364 = sbr.rel target = $region78
              $region77: #{run.1} parent=51 // pred_region
                _
              $region78: #{run.1} parent=51 // pred_fallthru
                _
            $region52: #{run.1} parent=47 // pred_fallthru
              _
            // Predicated region
            $region53: #{run.1} parent=47 // pred_check
              _
            $region54: #{run.1} parent=47 // pred_check_branch
              %327 = sbr.rel target = $region56
            $region55: #{run.1} parent=47 // pred_region
              loop: start=0, step=1, limit=1
              $region57: #{run.1} parent=55 // loop_pre_header
                _
              $region58: #{run.1} parent=55 // loop_header
                %s330 = sphi 0, %s334
                %p331 = scmp.ge.s32.totalorder %s330, 1
                %s335 = sphi %s321, %s321
                %s336 = sphi %s315, %s315
              $region59: #{run.1} parent=55 // loop_header_branch
                %333 = sbr.rel (%p331) target = $region63
              $region60: #{run.1} parent=55 // loop_body
                %v337 = vld [vmem:[%s335] sm:$0xff]
                %338 = vst [vmem:[%s336] sm:$0xff] %v337
                %v339 = vld [vmem:[%s335 + $0x18] sm:$0xff]
                %340 = vst [vmem:[%s336 + $0x8] sm:$0xff] %v339
                %v341 = vld [vmem:[%s335 + $0x30] sm:$0xff]
                %342 = vst [vmem:[%s336 + $0x10] sm:$0xff] %v341
                %v343 = vld [vmem:[%s335 + $0x48] sm:$0xff]
                %344 = vst [vmem:[%s336 + $0x18] sm:$0xff] %v343
              $region61: #{run.1} parent=55 // loop_footer
                %s334 = sadd.s32 1, %s330
              $region62: #{run.1} parent=55 // loop_footer_branch
                %329 = sbr.rel target = $region58
              $region63: #{run.1} parent=55 // loop_exit
                _
            $region56: #{run.1} parent=47 // pred_fallthru
              _
          $region48: #{run.1} parent=43 // pred_fallthru
            _
          %365 = vnop
        $region44: #{run.1} parent=39 // pred_fallthru
          _
      $region40: #{run.1} parent=5 // pred_fallthru
        _
      %p366 = scmp.le.s32.totalorder 1, %s17
      %p367 = scmp.lt.s32.totalorder %s17, 4
      %p368 = pnand %p366, %p367
      %p369 = pneg %p368
      // Predicated region
      $region79: #{run.1} parent=5 // pred_check
        _
      $region80: #{run.1} parent=5 // pred_check_branch
        %371 = sbr.rel (%p368) target = $region82
      $region81: #{run.1} parent=5 // pred_region
        %s372 = ssub.s32 %s17, 1
        %s373 = sand.u32 %s70, 1
        %s374 = sand.u32 %s70, 1
        %s375 = smul.addr %s374, 32
        %s376 = scalar_lea.vmem [#allocation4], %s375
        // Predicated region
        $region83: #{run.1} parent=81 // pred_check
          %p377 = pneg %p83
        $region84: #{run.1} parent=81 // pred_check_branch
          %379 = sbr.rel (%p377) target = $region86
        $region85: #{run.1} parent=81 // pred_region
          _
        $region86: #{run.1} parent=81 // pred_fallthru
          _
        %s380 = smul.u32 2, %s26
        %p381 = scmp.lt.s32.totalorder %s380, 1
        %s382 = scalar_select %p381, %s380, 1
        %s383 = smul.addr %s382, 8
        %s384 = scalar_lea.vmem %s0, %s383
        %p385 = pneg %p55
        %p386 = pneg %p52
        %s387 = sand.u32 %s70, 1
        %s388 = sand.u32 %s70, 1
        %s389 = smul.addr %s388, 32
        %s390 = scalar_lea.vmem [#allocation4], %s389
        %p391 = pneg %p83
        %p392 = pneg %p80
        %p393 = pneg %p104
        %p394 = pneg %p101
        %p395 = pneg %p125
        %p396 = pneg %p122
        %p397 = pneg %p146
        %p398 = pneg %p143
        %p399 = pneg %p167
        %p400 = pneg %p164
        %p401 = pneg %p188
        %p402 = pneg %p185
        %p403 = pneg %p214
        %p404 = pneg %p211
        %s405 = smul.u32 2, %s26
        %p406 = scmp.lt.s32.totalorder %s405, 1
        %s407 = scalar_select %p406, %s405, 1
        %s408 = smul.addr %s407, 8
        %s409 = scalar_lea.vmem %s7, %s408
        %p410 = pneg %p240
        %p411 = pneg %p237
        %s412 = smul.u32 2, %s26
        %p413 = scmp.lt.s32.totalorder %s412, 1
        %s414 = scalar_select %p413, %s412, 1
        %s415 = smul.addr %s414, 8
        %s416 = scalar_lea.vmem %s8, %s415
        %p417 = pneg %p266
        %p418 = pneg %p263
        %s419 = smul.u32 2, %s26
        %p420 = scmp.lt.s32.totalorder %s419, 1
        %s421 = scalar_select %p420, %s419, 1
        %s422 = smul.addr %s421, 8
        %s423 = scalar_lea.vmem %s9, %s422
        %s424 = smul.u32 2, %s26
        %p425 = scmp.lt.s32.totalorder %s424, 1
        %s426 = scalar_select %p425, %s424, 1
        %s427 = smul.addr %s426, 8
        %s428 = scalar_lea.vmem %s0, %s427
        %s429 = smul.u32 2, %s26
        %s430 = smul.u32 4, %s26
        %s431 = smul.u32 2, %s27
        %s432 = smul.u32 2, %s26
        %p433 = scmp.lt.s32.totalorder %s432, 1
        %s434 = scalar_select %p433, %s432, 1
        %s435 = smul.addr %s434, 8
        %s436 = scalar_lea.vmem %s7, %s435
        %s437 = smul.u32 2, %s26
        %s438 = smul.u32 2, %s26
        %p439 = scmp.lt.s32.totalorder %s438, 1
        %s440 = scalar_select %p439, %s438, 1
        %s441 = smul.addr %s440, 8
        %s442 = scalar_lea.vmem %s8, %s441
        %s443 = smul.u32 2, %s26
        %s444 = smul.u32 2, %s26
        %p445 = scmp.lt.s32.totalorder %s444, 1
        %s446 = scalar_select %p445, %s444, 1
        %s447 = smul.addr %s446, 8
        %s448 = scalar_lea.vmem %s9, %s447
        %s449 = smul.u32 2, %s26
        %p451 = scmp.eq.s32.totalorder %s27, 0
        // Predicated region
        $region87: #{run.1} parent=81 // pred_check
          %p452 = pneg %p451
        $region88: #{run.1} parent=81 // pred_check_branch
          %454 = sbr.rel (%p452) target = $region90
        $region89: #{run.1} parent=81 // pred_region
          %455 = vst [vmem:[#allocation2] sm:$0xff] 0.0
          %456 = vst [vmem:[#allocation2 + $0x8] sm:$0xff] 0.0
          %457 = vst [vmem:[#allocation2 + $0x10] sm:$0xff] 0.0
          %458 = vst [vmem:[#allocation2 + $0x18] sm:$0xff] 0.0
        $region90: #{run.1} parent=81 // pred_fallthru
          _
        %s459 = smul.u32 %s27, 256
        %s460 = sshra.s32 %s459, 3
        %s461 = sand.u32 %s459, 7
        %s462 = smul.addr %s460, 4
        %s463 = scalar_lea.vmem %s2, %s462
        %v464 = vld [vmem:[%s463] sm:$0xf]
        %v465 = vld [vmem:[%s463 + $0x4] sm:$0xf]
        %v466 = vld [vmem:[%s463 + $0x8] sm:$0xf]
        %v467 = vld [vmem:[%s463 + $0xc] sm:$0xf]
        %v468 = vld [vmem:[%s463 + $0x10] sm:$0xf]
        %v469 = vld [vmem:[%s463 + $0x14] sm:$0xf]
        %v470 = vld [vmem:[%s463 + $0x18] sm:$0xf]
        %v471 = vld [vmem:[%s463 + $0x1c] sm:$0xf]
        %v472 = vld [vmem:[%s463 + $0x20] sm:$0xf]
        %v473 = vld [vmem:[%s463 + $0x24] sm:$0xf]
        %v474 = vld [vmem:[%s463 + $0x28] sm:$0xf]
        %v475 = vld [vmem:[%s463 + $0x2c] sm:$0xf]
        %v476 = vld [vmem:[%s463 + $0x30] sm:$0xf]
        %v477 = vld [vmem:[%s463 + $0x34] sm:$0xf]
        %v478 = vld [vmem:[%s463 + $0x38] sm:$0xf]
        %v479 = vld [vmem:[%s463 + $0x3c] sm:$0xf]
        %v480 = vld [vmem:[%s463 + $0x40] sm:$0xf]
        %v481 = vld [vmem:[%s463 + $0x44] sm:$0xf]
        %v482 = vld [vmem:[%s463 + $0x48] sm:$0xf]
        %v483 = vld [vmem:[%s463 + $0x4c] sm:$0xf]
        %v484 = vld [vmem:[%s463 + $0x50] sm:$0xf]
        %v485 = vld [vmem:[%s463 + $0x54] sm:$0xf]
        %v486 = vld [vmem:[%s463 + $0x58] sm:$0xf]
        %v487 = vld [vmem:[%s463 + $0x5c] sm:$0xf]
        %v488 = vld [vmem:[%s463 + $0x60] sm:$0xf]
        %v489 = vld [vmem:[%s463 + $0x64] sm:$0xf]
        %v490 = vld [vmem:[%s463 + $0x68] sm:$0xf]
        %v491 = vld [vmem:[%s463 + $0x6c] sm:$0xf]
        %v492 = vld [vmem:[%s463 + $0x70] sm:$0xf]
        %v493 = vld [vmem:[%s463 + $0x74] sm:$0xf]
        %v494 = vld [vmem:[%s463 + $0x78] sm:$0xf]
        %v495 = vld [vmem:[%s463 + $0x7c] sm:$0xf]
        %v496 = vld [vmem:[#allocation2] sm:$0xff]
        %v497 = vld [vmem:[#allocation2 + $0x8] sm:$0xff]
        %v498 = vld [vmem:[#allocation2 + $0x10] sm:$0xff]
        %v499 = vld [vmem:[#allocation2 + $0x18] sm:$0xff]
        %v500 = vld [vmem:[%s376] sm:$0xff]
        %v501 = vld [vmem:[%s376 + $0x8] sm:$0xff]
        %v502 = vld [vmem:[%s376 + $0x10] sm:$0xff]
        %v503 = vld [vmem:[%s376 + $0x18] sm:$0xff]
        %v508 = vunpack.c.l.b16 %v500
        %v509 = vunpack.c.h.b16 %v500
        %v510 = vunpack.c.l.b16 %v501
        %v511 = vunpack.c.h.b16 %v501
        %v512 = vunpack.c.l.b16 %v502
        %v513 = vunpack.c.h.b16 %v502
        %v514 = vunpack.c.l.b16 %v503
        %v515 = vunpack.c.h.b16 %v503
        %v516 = vpack.c.b16 %v510, %v508
        %v517 = vpack.c.b16 %v511, %v509
        %v518 = vpack.c.b16 %v514, %v512
        %v519 = vpack.c.b16 %v515, %v513
        %v556 = vunpack.c.l.b16 %v464
        %v557 = vunpack.c.l.b16 %v465
        %v558 = vunpack.c.l.b16 %v466
        %v559 = vunpack.c.l.b16 %v467
        %v560 = vunpack.c.l.b16 %v468
        %v561 = vunpack.c.l.b16 %v469
        %v562 = vunpack.c.l.b16 %v470
        %v563 = vunpack.c.l.b16 %v471
        %v564 = vunpack.c.l.b16 %v472
        %v565 = vunpack.c.l.b16 %v473
        %v566 = vunpack.c.l.b16 %v474
        %v567 = vunpack.c.l.b16 %v475
        %v568 = vunpack.c.l.b16 %v476
        %v569 = vunpack.c.l.b16 %v477
        %v570 = vunpack.c.l.b16 %v478
        %v571 = vunpack.c.l.b16 %v479
        %v572 = vunpack.c.l.b16 %v480
        %v573 = vunpack.c.l.b16 %v481
        %v574 = vunpack.c.l.b16 %v482
        %v575 = vunpack.c.l.b16 %v483
        %v576 = vunpack.c.l.b16 %v484
        %v577 = vunpack.c.l.b16 %v485
        %v578 = vunpack.c.l.b16 %v486
        %v579 = vunpack.c.l.b16 %v487
        %v580 = vunpack.c.l.b16 %v488
        %v581 = vunpack.c.l.b16 %v489
        %v582 = vunpack.c.l.b16 %v490
        %v583 = vunpack.c.l.b16 %v491
        %v584 = vunpack.c.l.b16 %v492
        %v585 = vunpack.c.l.b16 %v493
        %v586 = vunpack.c.l.b16 %v494
        %v587 = vunpack.c.l.b16 %v495
        %v588 = vpack.c.b16 %v557, %v556
        %v589 = vpack.c.b16 %v559, %v558
        %v590 = vpack.c.b16 %v561, %v560
        %v591 = vpack.c.b16 %v563, %v562
        %v592 = vpack.c.b16 %v565, %v564
        %v593 = vpack.c.b16 %v567, %v566
        %v594 = vpack.c.b16 %v569, %v568
        %v595 = vpack.c.b16 %v571, %v570
        %v596 = vpack.c.b16 %v573, %v572
        %v597 = vpack.c.b16 %v575, %v574
        %v598 = vpack.c.b16 %v577, %v576
        %v599 = vpack.c.b16 %v579, %v578
        %v600 = vpack.c.b16 %v581, %v580
        %v601 = vpack.c.b16 %v583, %v582
        %v602 = vpack.c.b16 %v585, %v584
        %v603 = vpack.c.b16 %v587, %v586
        %620 = vmatprep.subr.bf16.mxu0 0
        %621 = vmatpush1.bf16.msra.mxu0 %v588
        %622 = vmatprep.subr.bf16.mxu0 0
        %623 = vmatpush1.bf16.msra.mxu0 %v589
        %624 = vmatprep.subr.bf16.mxu0 0
        %625 = vmatpush1.bf16.msra.mxu0 %v590
        %626 = vmatprep.subr.bf16.mxu0 0
        %627 = vmatpush1.bf16.msra.mxu0 %v591
        %628 = vmatprep.subr.bf16.mxu0 0
        %629 = vmatpush1.bf16.msra.mxu0 %v592
        %630 = vmatprep.subr.bf16.mxu0 0
        %631 = vmatpush1.bf16.msra.mxu0 %v593
        %632 = vmatprep.subr.bf16.mxu0 0
        %633 = vmatpush1.bf16.msra.mxu0 %v594
        %634 = vmatprep.subr.bf16.mxu0 0
        %635 = vmatpush1.bf16.msra.mxu0 %v595
        %636 = vmatprep.subr.bf16.mxu0 0
        %637 = vmatpush1.bf16.msra.mxu0 %v596
        %638 = vmatprep.subr.bf16.mxu0 0
        %639 = vmatpush1.bf16.msra.mxu0 %v597
        %640 = vmatprep.subr.bf16.mxu0 0
        %641 = vmatpush1.bf16.msra.mxu0 %v598
        %642 = vmatprep.subr.bf16.mxu0 0
        %643 = vmatpush1.bf16.msra.mxu0 %v599
        %644 = vmatprep.subr.bf16.mxu0 0
        %645 = vmatpush1.bf16.msra.mxu0 %v600
        %646 = vmatprep.subr.bf16.mxu0 0
        %647 = vmatpush1.bf16.msra.mxu0 %v601
        %648 = vmatprep.subr.bf16.mxu0 0
        %649 = vmatpush1.bf16.msra.mxu0 %v602
        %650 = vmatprep.subr.bf16.mxu0 0
        %651 = vmatpush1.bf16.msra.mxu0 %v603
        %652 = vmatprep.mubr.bf16.mxu0 %v517
        %653 = vmatmul.mubr.bf16.gmra.mrb[0].mxu0 %v516
        %v654 = vpop.f32.mrb[0].mxu0
        %v655 = vadd.f32 0.0, %v654
        %v656 = vpop.f32.mrb[0].mxu0
        %v657 = vpop.f32.mrb[0].mxu0
        %v658 = vadd.f32 0.0, %v657
        %v659 = vpop.f32.mrb[0].mxu0
        %660 = vmatprep.mubr.bf16.mxu0 %v519
        %661 = vmatmul.mubr.bf16.gmra.mrb[0].mxu0 %v518
        %v662 = vpop.f32.mrb[0].mxu0
        %v663 = vadd.f32 0.0, %v662
        %v664 = vpop.f32.mrb[0].mxu0
        %v665 = vpop.f32.mrb[0].mxu0
        %v666 = vadd.f32 0.0, %v665
        %v667 = vpop.f32.mrb[0].mxu0
        %668 = vdwg.mxu0
        %v669 = vadd.f32 %v496, %v655
        %v670 = vadd.f32 %v497, %v658
        %v671 = vadd.f32 %v498, %v663
        %v672 = vadd.f32 %v499, %v666
        %673 = vst [vmem:[#allocation2] sm:$0xff] %v669
        %674 = vst [vmem:[#allocation2 + $0x8] sm:$0xff] %v670
        %675 = vst [vmem:[#allocation2 + $0x10] sm:$0xff] %v671
        %676 = vst [vmem:[#allocation2 + $0x18] sm:$0xff] %v672
        %p677 = scmp.eq.s32.totalorder %s27, 2
        // Predicated region
        $region91: #{run.1} parent=81 // pred_check
          %p678 = pneg %p677
        $region92: #{run.1} parent=81 // pred_check_branch
          %680 = sbr.rel (%p678) target = $region94
        $region93: #{run.1} parent=81 // pred_region
          %v681 = vld [vmem:[%s4] sm:$0x1]
          %v682 = vld [vmem:[%s5] sm:$0x1]
          %s683 = sld [smem:[#allocation3]]
          %v684 = vld [vmem:[%s428] sm:$0xff]
          %v685 = vld [vmem:[%s428 + $0x8] sm:$0xff]
          %v686 = vld [vmem:[#allocation2] sm:$0xff]
          %v687 = vld [vmem:[#allocation2 + $0x8] sm:$0xff]
          %v688 = vld [vmem:[#allocation2 + $0x10] sm:$0xff]
          %v689 = vld [vmem:[#allocation2 + $0x18] sm:$0xff]
          %v691 = vlaneseq
          %v692 = vshrl.u32 %v691, 7
          %v693 = vsub.s32 0, %v692
          %v694 = vrot.slane %v681, %v693
          %v696 = vadd.f32 %v686, %v694
          %v697 = vadd.f32 %v687, %v694
          %v698 = vadd.f32 %v688, %v694
          %v699 = vadd.f32 %v689, %v694
          %701 = vset.pattern.permute.xlu0 0
          %702 = vperm.xlu0 %701, %v684
          %v703 = vpop.permute.xlu0 %702
          %706 = vset.pattern.permute.xlu0 0
          %707 = vperm.xlu0 %706, %v685
          %v708 = vpop.permute.xlu0 %707
          %v710 = vmul.f32 %v703, %v696
          %v711 = vmul.f32 %v708, %v697
          %v712 = vsub.f32 1.0, %v684
          %v713 = vsub.f32 1.0, %v685
          %715 = vset.pattern.permute.xlu0 0
          %716 = vperm.xlu0 %715, %v712
          %v717 = vpop.permute.xlu0 %716
          %720 = vset.pattern.permute.xlu0 0
          %721 = vperm.xlu0 %720, %v713
          %v722 = vpop.permute.xlu0 %721
          %v724 = vmul.f32 %v717, %v698
          %v725 = vmul.f32 %v722, %v699
          %v726 = vadd.f32 %v710, %v724
          %v727 = vadd.f32 %v711, %v725
          %vm728 = vcmp.gt.f32.partialorder %v696, 0.0
          %vm729 = vcmp.gt.f32.partialorder %v697, 0.0
          %v730 = vmul.f32 %v696, 0.2
          %v731 = vmul.f32 %v697, 0.2
          %v732 = vsel %vm728, %v696, %v730
          %v733 = vsel %vm729, %v697, %v731
          %vm734 = vcmp.gt.f32.partialorder %v698, 0.0
          %vm735 = vcmp.gt.f32.partialorder %v699, 0.0
          %v736 = vmul.f32 %v698, 0.2
          %v737 = vmul.f32 %v699, 0.2
          %v738 = vsel %vm734, %v698, %v736
          %v739 = vsel %vm735, %v699, %v737
          %v741 = vlaneseq
          %v742 = vshrl.u32 %v741, 7
          %v743 = vsub.s32 0, %v742
          %v744 = vrot.slane %v682, %v743
          %v746 = vmul.f32 %v732, %v744
          %v747 = vmul.f32 %v733, %v744
          %748 = vadd.xlane.f32.xlu0 %v746
          %v749 = vpop.xlane.xlu0 %748
          %750 = vadd.xlane.f32.xlu0 %v747
          %v751 = vpop.xlane.xlu0 %750
          %v752 = vstv %s683
          %v753 = vadd.f32 %v749, %v752
          %v754 = vadd.f32 %v751, %v752
          %v755 = vmul.f32 %v738, %v744
          %v756 = vmul.f32 %v739, %v744
          %757 = vadd.xlane.f32.xlu0 %v755
          %v758 = vpop.xlane.xlu0 %757
          %759 = vadd.xlane.f32.xlu0 %v756
          %v760 = vpop.xlane.xlu0 %759
          %v761 = vadd.f32 %v758, %v752
          %v762 = vadd.f32 %v760, %v752
          %vm763 = vcmp.gt.f32.partialorder %v726, 0.0
          %vm764 = vcmp.gt.f32.partialorder %v727, 0.0
          %v765 = vsel %vm763, 1.0, 0.2
          %v766 = vsel %vm764, 1.0, 0.2
          %v767 = vmul.f32 %v765, %v744
          %v768 = vmul.f32 %v766, %v744
          %v769 = vld [vmem:[%s3] sm:$0xff]
          %v770 = vld [vmem:[%s3 + $0x8] sm:$0xff]
          %v771 = vld [vmem:[%s3 + $0x10] sm:$0xff]
          %v772 = vld [vmem:[%s3 + $0x18] sm:$0xff]
          %v773 = vld [vmem:[%s3 + $0x20] sm:$0xff]
          %v774 = vld [vmem:[%s3 + $0x28] sm:$0xff]
          %v775 = vld [vmem:[%s3 + $0x30] sm:$0xff]
          %v776 = vld [vmem:[%s3 + $0x38] sm:$0xff]
          %v777 = vld [vmem:[%s3 + $0x40] sm:$0xff]
          %v778 = vld [vmem:[%s3 + $0x48] sm:$0xff]
          %v779 = vld [vmem:[%s3 + $0x50] sm:$0xff]
          %v780 = vld [vmem:[%s3 + $0x58] sm:$0xff]
          %v781 = vld [vmem:[%s3 + $0x60] sm:$0xff]
          %v782 = vld [vmem:[%s3 + $0x68] sm:$0xff]
          %v783 = vld [vmem:[%s3 + $0x70] sm:$0xff]
          %v784 = vld [vmem:[%s3 + $0x78] sm:$0xff]
          %785 = vmatprep.subr.mxu0 0.0
          %786 = vmatpush1.msra.mxu0 %v769
          %787 = vmatprep.subr.mxu0 0.0
          %788 = vmatpush1.msra.mxu0 %v770
          %789 = vmatprep.subr.mxu0 0.0
          %790 = vmatpush1.msra.mxu0 %v771
          %791 = vmatprep.subr.mxu0 0.0
          %792 = vmatpush1.msra.mxu0 %v772
          %793 = vmatprep.subr.mxu0 0.0
          %794 = vmatpush1.msra.mxu0 %v773
          %795 = vmatprep.subr.mxu0 0.0
          %796 = vmatpush1.msra.mxu0 %v774
          %797 = vmatprep.subr.mxu0 0.0
          %798 = vmatpush1.msra.mxu0 %v775
          %799 = vmatprep.subr.mxu0 0.0
          %800 = vmatpush1.msra.mxu0 %v776
          %801 = vmatprep.subr.mxu0 0.0
          %802 = vmatpush1.msra.mxu0 %v777
          %803 = vmatprep.subr.mxu0 0.0
          %804 = vmatpush1.msra.mxu0 %v778
          %805 = vmatprep.subr.mxu0 0.0
          %806 = vmatpush1.msra.mxu0 %v779
          %807 = vmatprep.subr.mxu0 0.0
          %808 = vmatpush1.msra.mxu0 %v780
          %809 = vmatprep.subr.mxu0 0.0
          %810 = vmatpush1.msra.mxu0 %v781
          %811 = vmatprep.subr.mxu0 0.0
          %812 = vmatpush1.msra.mxu0 %v782
          %813 = vmatprep.subr.mxu0 0.0
          %814 = vmatpush1.msra.mxu0 %v783
          %815 = vmatprep.subr.mxu0 0.0
          %816 = vmatpush1.msra.mxu0 %v784
          %817 = vmatprep.subr.mxu0 0.0
          %818 = vmatpush1.msra.mxu0 0.0
          %819 = vmatprep.subr.mxu0 0.0
          %820 = vmatpush1.msra.mxu0 0.0
          %821 = vmatprep.subr.mxu0 0.0
          %822 = vmatpush1.msra.mxu0 0.0
          %823 = vmatprep.subr.mxu0 0.0
          %824 = vmatpush1.msra.mxu0 0.0
          %825 = vmatprep.subr.mxu0 0.0
          %826 = vmatpush1.msra.mxu0 0.0
          %827 = vmatprep.subr.mxu0 0.0
          %828 = vmatpush1.msra.mxu0 0.0
          %829 = vmatprep.subr.mxu0 0.0
          %830 = vmatpush1.msra.mxu0 0.0
          %831 = vmatprep.subr.mxu0 0.0
          %832 = vmatpush1.msra.mxu0 0.0
          %833 = vmatprep.subr.mxu0 0.0
          %834 = vmatpush1.msra.mxu0 0.0
          %835 = vmatprep.subr.mxu0 0.0
          %836 = vmatpush1.msra.mxu0 0.0
          %837 = vmatprep.subr.mxu0 0.0
          %838 = vmatpush1.msra.mxu0 0.0
          %839 = vmatprep.subr.mxu0 0.0
          %840 = vmatpush1.msra.mxu0 0.0
          %841 = vmatprep.subr.mxu0 0.0
          %842 = vmatpush1.msra.mxu0 0.0
          %843 = vmatprep.subr.mxu0 0.0
          %844 = vmatpush1.msra.mxu0 0.0
          %845 = vmatprep.subr.mxu0 0.0
          %846 = vmatpush1.msra.mxu0 0.0
          %847 = vmatprep.subr.mxu0 0.0
          %848 = vmatpush1.msra.mxu0 0.0
          %849 = vmatprep.mubr.f32.mxu0 0.0
          %850 = vmatmul.mubr.f32.gmra.mrb[0].mxu0 %v767
          %v851 = vpop.f32.mrb[0].mxu0
          %v852 = vadd.f32 0.0, %v851
          %v853 = vpop.f32.mrb[0].mxu0
          %854 = vmatprep.mubr.f32.mxu0 0.0
          %855 = vmatmul.mubr.f32.gmra.mrb[0].mxu0 %v768
          %v856 = vpop.f32.mrb[0].mxu0
          %v857 = vadd.f32 0.0, %v856
          %v858 = vpop.f32.mrb[0].mxu0
          %859 = vdwg.mxu0
          %v860 = vmul.f32 %v852, %v767
          %v861 = vmul.f32 %v857, %v768
          %862 = vadd.xlane.f32.xlu0 %v860
          %v863 = vpop.xlane.xlu0 %862
          %864 = vadd.xlane.f32.xlu0 %v861
          %v865 = vpop.xlane.xlu0 %864
          %866 = vst [vmem:[%s436] sm:$0xff] %v753
          %867 = vst [vmem:[%s436 + $0x8] sm:$0xff] %v754
          %868 = vst [vmem:[%s442] sm:$0xff] %v761
          %869 = vst [vmem:[%s442 + $0x8] sm:$0xff] %v762
          %870 = vst [vmem:[%s448] sm:$0xff] %v863
          %871 = vst [vmem:[%s448 + $0x8] sm:$0xff] %v865
        $region94: #{run.1} parent=81 // pred_fallthru
          _
        %s872 = smul.u32 2, %s26
        %p873 = scmp.lt.s32.totalorder %s872, 1
        %s874 = scalar_select %p873, %s872, 1
        %s875 = smul.addr %s874, 8
        %s876 = scalar_lea.vmem %s7, %s875
        %s877 = smul.u32 2, %s26
        %p878 = scmp.lt.s32.totalorder %s877, 1
        %s879 = scalar_select %p878, %s877, 1
        %s880 = smul.addr %s879, 8
        %s881 = scalar_lea.vmem %s8, %s880
        %s882 = smul.u32 2, %s26
        %p883 = scmp.lt.s32.totalorder %s882, 1
        %s884 = scalar_select %p883, %s882, 1
        %s885 = smul.addr %s884, 8
        %s886 = scalar_lea.vmem %s9, %s885
        // Predicated region
        $region95: #{run.1} parent=81 // pred_check
          %p887 = pneg %p211
        $region96: #{run.1} parent=81 // pred_check_branch
          %889 = sbr.rel (%p887) target = $region98
        $region97: #{run.1} parent=81 // pred_region
          %s890 = smul.u32 2, %s26
        $region98: #{run.1} parent=81 // pred_fallthru
          _
        // Predicated region
        $region99: #{run.1} parent=81 // pred_check
          %p891 = pneg %p237
        $region100: #{run.1} parent=81 // pred_check_branch
          %893 = sbr.rel (%p891) target = $region102
        $region101: #{run.1} parent=81 // pred_region
          %s894 = smul.u32 2, %s26
        $region102: #{run.1} parent=81 // pred_fallthru
          _
        // Predicated region
        $region103: #{run.1} parent=81 // pred_check
          %p895 = pneg %p263
        $region104: #{run.1} parent=81 // pred_check_branch
          %897 = sbr.rel (%p895) target = $region106
        $region105: #{run.1} parent=81 // pred_region
          %s898 = smul.u32 2, %s26
        $region106: #{run.1} parent=81 // pred_fallthru
          _
        // Predicated region
        $region107: #{run.1} parent=81 // pred_check
          %p899 = pneg %p211
        $region108: #{run.1} parent=81 // pred_check_branch
          %901 = sbr.rel (%p899) target = $region110
        $region109: #{run.1} parent=81 // pred_region
          %s902 = smul.u32 2, %s26
          %p903 = scmp.lt.s32.totalorder %s902, 1
          %s904 = scalar_select %p903, %s902, 1
          %s905 = smul.addr %s904, 8
          %s906 = scalar_lea.vmem %s7, %s905
        $region110: #{run.1} parent=81 // pred_fallthru
          _
        // Predicated region
        $region111: #{run.1} parent=81 // pred_check
          %p907 = pneg %p237
        $region112: #{run.1} parent=81 // pred_check_branch
          %909 = sbr.rel (%p907) target = $region114
        $region113: #{run.1} parent=81 // pred_region
          %s910 = smul.u32 2, %s26
          %p911 = scmp.lt.s32.totalorder %s910, 1
          %s912 = scalar_select %p911, %s910, 1
          %s913 = smul.addr %s912, 8
          %s914 = scalar_lea.vmem %s8, %s913
        $region114: #{run.1} parent=81 // pred_fallthru
          _
        // Predicated region
        $region115: #{run.1} parent=81 // pred_check
          %p915 = pneg %p263
        $region116: #{run.1} parent=81 // pred_check_branch
          %917 = sbr.rel (%p915) target = $region118
        $region117: #{run.1} parent=81 // pred_region
          %s918 = smul.u32 2, %s26
          %p919 = scmp.lt.s32.totalorder %s918, 1
          %s920 = scalar_select %p919, %s918, 1
          %s921 = smul.addr %s920, 8
          %s922 = scalar_lea.vmem %s9, %s921
        $region118: #{run.1} parent=81 // pred_fallthru
          _
      $region82: #{run.1} parent=5 // pred_fallthru
        _
      %p923 = scmp.le.s32.totalorder 2, %s17
      // Predicated region
      $region119: #{run.1} parent=5 // pred_check
        %p924 = pneg %p923
      $region120: #{run.1} parent=5 // pred_check_branch
        %926 = sbr.rel (%p924) target = $region122
      $region121: #{run.1} parent=5 // pred_region
        %s927 = ssub.s32 %s17, 2
      $region122: #{run.1} parent=5 // pred_fallthru
        _
    $region6: #{run.1} parent=1 // loop_footer
      %s21 = sadd.s32 1, %s17
    $region7: #{run.1} parent=1 // loop_footer_branch
      %16 = sbr.rel target = $region3
    $region8: #{run.1} parent=1 // loop_exit
      _

</llo_original>
